<compile_context>
chip_gen: v5e
topology: v5e:2x2
jax: 0.10.0
libtpu: 0.0.40
codegen_flags: <defaults>
</compile_context>

<pallas_src>
import functools
import math

import jax
import jax.numpy as jnp
from jax.experimental import pallas as pl
from jax.experimental.pallas import tpu as pltpu


def _hybrid_relu_act_kernel(x_ref, o_ref, *, alpha):
    # x_ref / o_ref: (TILE_ROWS, V) blocks in VMEM; each row is independent.
    x = x_ref[...].astype(jnp.float32)

    # Per-row L2 norm; hoist the reciprocal so the per-element op is a multiply
    # (one EUP reciprocal per row instead of one per element).
    sumsq = jnp.sum(x * x, axis=-1, keepdims=True)
    inv_norm = pl.reciprocal(jnp.sqrt(sumsq) + 1e-10, approx=False)

    relu_x = jnp.maximum(x, 0.0)
    scale = relu_x * inv_norm

    # log1p(y) written as log(1 + y): relative error ~1e-7 for the value ranges
    # here (scale in [0,1], relu_x >= 0), well inside the check tolerance, and
    # log has a guaranteed Mosaic lowering.
    bounded_stable = jnp.tanh(x / (1.0 + jnp.log(1.0 + scale)))
    bounded_relu = jnp.tanh(x / (1.0 + jnp.log(1.0 + relu_x)))

    bounded = alpha * bounded_stable + (1.0 - alpha) * bounded_relu
    probs = (bounded + 1.0) * 0.5

    denom = jnp.sum(probs, axis=-1, keepdims=True) + 1e-10
    out = probs * pl.reciprocal(denom, approx=False)

    o_ref[...] = out.astype(o_ref.dtype)


def hybrid_gradient_stable_relu_activation(
    x,
    *,
    alpha=0.3,
    block_bytes=2 * 1024 * 1024,          # target bytes per (in or out) block
    vmem_limit_bytes=48 * 1024 * 1024,    # safe on v5e/v6e (128 MiB) and v7x (64 MiB)
):
    """x: (..., V) float array. Returns same shape/dtype."""
    orig_shape = x.shape
    v = orig_shape[-1]
    rows = math.prod(orig_shape[:-1]) if len(orig_shape) > 1 else 1
    x2d = x.reshape(rows, v)

    itemsize = jnp.dtype(x.dtype).itemsize
    # Largest row tile (multiple of 8 sublanes) whose block fits the budget.
    rows_per_block = max(8, (block_bytes // (v * itemsize)) // 8 * 8)
    if rows <= rows_per_block:
        tile_rows = rows  # single block == full array extent (always legal)
    else:
        tile_rows = rows_per_block
    grid = (pl.cdiv(rows, tile_rows),)  # ragged tail handled by Pallas masking

    kernel = functools.partial(_hybrid_relu_act_kernel, alpha=alpha)

    out2d = pl.pallas_call(
        kernel,
        out_shape=jax.ShapeDtypeStruct((rows, v), x.dtype),
        grid_spec=pltpu.PrefetchScalarGridSpec(
            num_scalar_prefetch=0,
            grid=grid,
            in_specs=[pl.BlockSpec((tile_rows, v), lambda i: (i, 0))],
            out_specs=pl.BlockSpec((tile_rows, v), lambda i: (i, 0)),
        ),
        compiler_params=pltpu.CompilerParams(
            dimension_semantics=("parallel",),
            vmem_limit_bytes=vmem_limit_bytes,
        ),
    )(x2d)

    return out2d.reshape(orig_shape)


def _reference(x, alpha=0.3):
    x = x.astype(jnp.float32)
    norm = jnp.sqrt(jnp.sum(x * x, axis=-1, keepdims=True)) + 1e-10
    scale = jnp.maximum(x, 0.0) / norm
    bounded_stable = jnp.tanh(x / (1.0 + jnp.log1p(scale)))
    scale_relu = jnp.log1p(jnp.maximum(x, 0.0))
    bounded_relu = jnp.tanh(x / (1.0 + scale_relu))
    bounded = alpha * bounded_stable + (1.0 - alpha) * bounded_relu
    probs = (bounded + 1.0) / 2.0
    return probs / (jnp.sum(probs, axis=-1, keepdims=True) + 1e-10)


if __name__ == "__main__":
    key = jax.random.PRNGKey(0)

    # Shapes consistent with the module: (batch, seq, vocab) logits.
    batch, seq, vocab = 2, 8, 128
    x = jax.random.normal(key, (batch, seq, vocab), dtype=jnp.float32) * 3.0

    out = jax.block_until_ready(hybrid_gradient_stable_relu_activation(x))
    ref = _reference(x)
    assert out.shape == x.shape
    assert bool(jnp.allclose(out, ref, atol=2e-5, rtol=2e-5)), float(
        jnp.max(jnp.abs(out - ref))
    )

    # Exercise the multi-block + ragged-tail path (rows=150 not a multiple of
    # the forced 8-row tile) without any wrapper padding copy.
    key2 = jax.random.PRNGKey(1)
    x2 = jax.random.normal(key2, (3, 50, 256), dtype=jnp.float32) * 2.0
    out2 = jax.block_until_ready(
        hybrid_gradient_stable_relu_activation(x2, block_bytes=8 * 256 * 4)
    )
    ref2 = _reference(x2)
    assert out2.shape == x2.shape
    assert bool(jnp.allclose(out2, ref2, atol=2e-5, rtol=2e-5)), float(
        jnp.max(jnp.abs(out2 - ref2))
    )

    print("KERNEL_OK")
</pallas_src>

<mosaic_0001>
module attributes {stable_mosaic.version = 11 : i64} {
  func.func @_hybrid_relu_act_kernel(%arg0: i32, %arg1: memref<16x128xf32, #tpu.memory_space<vmem>>, %arg2: memref<16x128xf32, #tpu.memory_space<vmem>>) attributes {dimension_semantics = [#tpu.dimension_semantics<parallel>], iteration_bounds = array<i64: 1>, scalar_prefetch = 0 : i64, scratch_operands = 0 : i64, tpu.core_type = #tpu.core_type<tc>, window_params = [{transform_indices = @transform_0, window_bounds = array<i64: 16, 128>}, {transform_indices = @transform_1, window_bounds = array<i64: 16, 128>}]} {
    %c0 = arith.constant 0 : index
    %c0_0 = arith.constant 0 : index
    %0 = vector.load %arg1[%c0, %c0_0] : memref<16x128xf32, #tpu.memory_space<vmem>>, vector<16x128xf32>
    %1 = arith.mulf %0, %0 : vector<16x128xf32>
    %cst = arith.constant dense<0.000000e+00> : vector<16xf32>
    %2 = vector.multi_reduction <add>, %1, %cst [1] : vector<16x128xf32> to vector<16xf32>
    %3 = vector.shape_cast %2 : vector<16xf32> to vector<16x1xf32>
    %4 = math.sqrt %3 : vector<16x1xf32>
    %cst_1 = arith.constant 1.000000e-10 : f32
    %5 = vector.broadcast %cst_1 : f32 to vector<16x1xf32>
    %6 = arith.addf %4, %5 : vector<16x1xf32>
    %7 = tpu.reciprocal %6 : vector<16x1xf32> -> vector<16x1xf32>
    %cst_2 = arith.constant 0.000000e+00 : f32
    %8 = vector.broadcast %cst_2 : f32 to vector<16x128xf32>
    %9 = arith.maximumf %0, %8 : vector<16x128xf32>
    %10 = vector.broadcast %7 : vector<16x1xf32> to vector<16x128xf32>
    %11 = arith.mulf %9, %10 : vector<16x128xf32>
    %cst_3 = arith.constant 1.000000e+00 : f32
    %12 = vector.broadcast %cst_3 : f32 to vector<16x128xf32>
    %13 = arith.addf %12, %11 : vector<16x128xf32>
    %14 = math.log %13 : vector<16x128xf32>
    %cst_4 = arith.constant 1.000000e+00 : f32
    %15 = vector.broadcast %cst_4 : f32 to vector<16x128xf32>
    %16 = arith.addf %15, %14 : vector<16x128xf32>
    %17 = arith.divf %0, %16 : vector<16x128xf32>
    %18 = math.tanh %17 : vector<16x128xf32>
    %cst_5 = arith.constant 1.000000e+00 : f32
    %19 = vector.broadcast %cst_5 : f32 to vector<16x128xf32>
    %20 = arith.addf %19, %9 : vector<16x128xf32>
    %21 = math.log %20 : vector<16x128xf32>
    %cst_6 = arith.constant 1.000000e+00 : f32
    %22 = vector.broadcast %cst_6 : f32 to vector<16x128xf32>
    %23 = arith.addf %22, %21 : vector<16x128xf32>
    %24 = arith.divf %0, %23 : vector<16x128xf32>
    %25 = math.tanh %24 : vector<16x128xf32>
    %cst_7 = arith.constant 3.000000e-01 : f32
    %26 = vector.broadcast %cst_7 : f32 to vector<16x128xf32>
    %27 = arith.mulf %26, %18 : vector<16x128xf32>
    %cst_8 = arith.constant 0.699999988 : f32
    %28 = vector.broadcast %cst_8 : f32 to vector<16x128xf32>
    %29 = arith.mulf %28, %25 : vector<16x128xf32>
    %30 = arith.addf %27, %29 : vector<16x128xf32>
    %cst_9 = arith.constant 1.000000e+00 : f32
    %31 = vector.broadcast %cst_9 : f32 to vector<16x128xf32>
    %32 = arith.addf %30, %31 : vector<16x128xf32>
    %cst_10 = arith.constant 5.000000e-01 : f32
    %33 = vector.broadcast %cst_10 : f32 to vector<16x128xf32>
    %34 = arith.mulf %32, %33 : vector<16x128xf32>
    %cst_11 = arith.constant dense<0.000000e+00> : vector<16xf32>
    %35 = vector.multi_reduction <add>, %34, %cst_11 [1] : vector<16x128xf32> to vector<16xf32>
    %36 = vector.shape_cast %35 : vector<16xf32> to vector<16x1xf32>
    %cst_12 = arith.constant 1.000000e-10 : f32
    %37 = vector.broadcast %cst_12 : f32 to vector<16x1xf32>
    %38 = arith.addf %36, %37 : vector<16x1xf32>
    %39 = tpu.reciprocal %38 : vector<16x1xf32> -> vector<16x1xf32>
    %40 = vector.broadcast %39 : vector<16x1xf32> to vector<16x128xf32>
    %41 = arith.mulf %34, %40 : vector<16x128xf32>
    %c0_13 = arith.constant 0 : index
    %c0_14 = arith.constant 0 : index
    %42 = vector.load %arg2[%c0_13, %c0_14] : memref<16x128xf32, #tpu.memory_space<vmem>>, vector<16x128xf32>
    tpu.vector_store %arg2[%c0_13, %c0_14], %41 {strides = array<i32>} : memref<16x128xf32, #tpu.memory_space<vmem>>, vector<16x128xf32>,
    return
  }
  func.func @transform_0(%arg0: i32) -> (i32, i32) {
    %c0_i32 = arith.constant 0 : i32
    %c0_i32_0 = arith.constant 0 : i32
    return %arg0, %c0_i32 : i32, i32
  }
  func.func @transform_1(%arg0: i32) -> (i32, i32) {
    %c0_i32 = arith.constant 0 : i32
    %c0_i32_0 = arith.constant 0 : i32
    return %arg0, %c0_i32 : i32, i32
  }
}

</mosaic_0001>

<llo_original>
// kernel: tpu_custom_call.1
$region0: #{tpu_custom_call.1}
  #allocation0 [shape = 'u32[]', space=smem, size = 0x4, offset = 0x4, fixed_abs, tag = 'smem constant byte address 0x4 - core index']
  #allocation1 [shape = 'u32[72,128]{1,0:T(1,128)}', space=vmem, size = 0x9000, scoped, tag = 'internal scratch']
  %s0 = inlined_call_operand.hbm [shape: f32[16,128], index: 0, kind: input, shape index: {}]
  %s1 = inlined_call_operand.hbm [shape: f32[16,128], index: 1, kind: output, shape index: {}]
  %s2 = sld [smem:[#allocation0]]
  $region18: #{tpu_custom_call.1} parent=0
    _
  %s4 = ssub.s32 1, %s2
  %s5 = scalar_select 0, %s4, %s2
  $region1: #{tpu_custom_call.1} parent=0
    #allocation2 [shape = 'u8[8192]{0}', space=vmem, size = 0x2000, scoped, tag = 'input window, operand 0, single buffered']
    #allocation3 [shape = 's32[1]{0}', space=sflag, size = 0x4, scoped, tag = 'scoped memory for tpu_custom_call.1']
    #allocation4 [shape = 's32[1]{0}', space=sflag, size = 0x4, scoped, tag = 'scoped memory for tpu_custom_call.1']
    #allocation5 [shape = 'u8[8192]{0}', space=vmem, size = 0x2000, scoped, tag = 'output window, operand 0, single buffered']
    %6 = vsyncpa [#allocation3], 0
    %7 = vsyncpa [#allocation4], 0
    // Predicated region
    $region2: #{tpu_custom_call.1} parent=1 // pred_check
      _
    $region3: #{tpu_custom_call.1} parent=1 // pred_check_branch
      %9 = sbr.rel (0) target = $region5
    $region4: #{tpu_custom_call.1} parent=1 // pred_region
      %11 = vsyncadd [#allocation3], 0
      %s12 = sshll.u32 %s0, 4
      %s13 = int_to_ptr.hbm [resolvable:$true] %s12
      %s14 = sshll.u32 [#allocation2], 4
      %s15 = int_to_ptr.vmem [resolvable:$true] %s14
      %20 = dma.hbm_to_vmem [thread:$0]  %s13, 256, %s15, [#allocation3], 128, 128, 8
    $region5: #{tpu_custom_call.1} parent=1 // pred_fallthru
      _
    // Predicated region
    $region6: #{tpu_custom_call.1} parent=1 // pred_check
      _
    $region7: #{tpu_custom_call.1} parent=1 // pred_check_branch
      %22 = sbr.rel (0) target = $region9
    $region8: #{tpu_custom_call.1} parent=1 // pred_region
      %24 = dma.done [#allocation3], 256
    $region9: #{tpu_custom_call.1} parent=1 // pred_fallthru
      _
    %v25 = vld [vmem:[#allocation2] sm:$0xff]
    %v26 = vld [vmem:[#allocation2 + $0x8] sm:$0xff]
    %v27 = vmul.f32 %v25, %v25
    %v28 = vmul.f32 %v26, %v26
    %29 = vadd.xlane.f32.xlu0 %v27
    %v30 = vpop.xlane.xlu0 %29
    %31 = vadd.xlane.f32.xlu0 %v28
    %v32 = vpop.xlane.xlu0 %31
    %v33 = vrsqrt.pop %v30
    %v34 = vmul.f32 %v33, %v30
    %v35 = vmul.f32 %v34, %v33
    %v36 = vmul.f32 0.5, %v35
    %v37 = vsub.f32 1.5, %v36
    %v38 = vmul.f32 %v33, %v37
    %v39 = vmul.f32 %v30, %v38
    %vm40 = vcmp.eq.f32.partialorder %v30, inf
    %v41 = vsel %vm40, %v30, %v39
    %vm42 = vcmp.eq.f32.partialorder %v30, 0.0
    %v43 = vand.u32 %v30, 2147483648
    %v44 = vsel %vm42, %v43, %v41
    %v45 = vrsqrt.pop %v32
    %v46 = vmul.f32 %v45, %v32
    %v47 = vmul.f32 %v46, %v45
    %v48 = vmul.f32 0.5, %v47
    %v49 = vsub.f32 1.5, %v48
    %v50 = vmul.f32 %v45, %v49
    %v51 = vmul.f32 %v32, %v50
    %vm52 = vcmp.eq.f32.partialorder %v32, inf
    %v53 = vsel %vm52, %v32, %v51
    %vm54 = vcmp.eq.f32.partialorder %v32, 0.0
    %v55 = vand.u32 %v32, 2147483648
    %v56 = vsel %vm54, %v55, %v53
    %v57 = vadd.f32 %v44, 1e-10
    %v58 = vadd.f32 %v56, 1e-10
    %v59 = vrcp.pop %v57
    %v60 = vmul.f32 %v57, %v59
    %v61 = vsub.f32 1.0, %v60
    %v62 = vmul.f32 %v59, %v61
    %v63 = vadd.f32 %v59, %v62
    %vm64 = vweird.f32 %v57
    %vm65 = vweird.f32 %v59
    %vm66 = vmor %vm64, %vm65
    %v67 = vsel %vm66, %v59, %v63
    %v68 = vand.u32 2147483647, %v57
    %vm69 = vcmp.eq.f32.partialorder %v68, 8.507059e+37
    %v70 = vand.u32 %v57, 2147483648
    %v71 = vor.u32 1.1754944e-38, %v70
    %v72 = vsel %vm69, %v71, %v67
    %v73 = vrcp.pop %v58
    %v74 = vmul.f32 %v58, %v73
    %v75 = vsub.f32 1.0, %v74
    %v76 = vmul.f32 %v73, %v75
    %v77 = vadd.f32 %v73, %v76
    %vm78 = vweird.f32 %v58
    %vm79 = vweird.f32 %v73
    %vm80 = vmor %vm78, %vm79
    %v81 = vsel %vm80, %v73, %v77
    %v82 = vand.u32 2147483647, %v58
    %vm83 = vcmp.eq.f32.partialorder %v82, 8.507059e+37
    %v84 = vand.u32 %v58, 2147483648
    %v85 = vor.u32 1.1754944e-38, %v84
    %v86 = vsel %vm83, %v85, %v81
    %v87 = vmax.f32 %v25, 0.0
    %v88 = vmax.f32 %v26, 0.0
    %v89 = vmul.f32 %v87, %v72
    %v90 = vmul.f32 %v88, %v86
    %v91 = vadd.f32 %v89, 1.0
    %v92 = vadd.f32 %v90, 1.0
    %v93 = vlog2.pop %v91
    %v94 = vmul.f32 %v93, 0.6931472
    %v95 = vlog2.pop %v92
    %v96 = vmul.f32 %v95, 0.6931472
    %v97 = vadd.f32 %v94, 1.0
    %v98 = vadd.f32 %v96, 1.0
    %v99 = vrcp.pop %v97
    %v100 = vmul.f32 %v97, %v99
    %v101 = vsub.f32 1.0, %v100
    %v102 = vmul.f32 %v99, %v101
    %v103 = vadd.f32 %v99, %v102
    %vm104 = vweird.f32 %v97
    %vm105 = vweird.f32 %v99
    %vm106 = vmor %vm104, %vm105
    %v107 = vsel %vm106, %v99, %v103
    %v108 = vand.u32 2147483647, %v97
    %vm109 = vcmp.eq.f32.partialorder %v108, 8.507059e+37
    %v110 = vand.u32 %v97, 2147483648
    %v111 = vor.u32 1.1754944e-38, %v110
    %v112 = vsel %vm109, %v111, %v107
    %v113 = vmul.f32 %v25, %v112
    %v114 = vrcp.pop %v98
    %v115 = vmul.f32 %v98, %v114
    %v116 = vsub.f32 1.0, %v115
    %v117 = vmul.f32 %v114, %v116
    %v118 = vadd.f32 %v114, %v117
    %vm119 = vweird.f32 %v98
    %vm120 = vweird.f32 %v114
    %vm121 = vmor %vm119, %vm120
    %v122 = vsel %vm121, %v114, %v118
    %v123 = vand.u32 2147483647, %v98
    %vm124 = vcmp.eq.f32.partialorder %v123, 8.507059e+37
    %v125 = vand.u32 %v98, 2147483648
    %v126 = vor.u32 1.1754944e-38, %v125
    %v127 = vsel %vm124, %v126, %v122
    %v128 = vmul.f32 %v26, %v127
    %v129 = vtanh.pop %v113
    %v130 = vtanh.pop %v128
    %v131 = vadd.f32 %v87, 1.0
    %v132 = vadd.f32 %v88, 1.0
    %v133 = vlog2.pop %v131
    %v134 = vmul.f32 %v133, 0.6931472
    %v135 = vlog2.pop %v132
    %v136 = vmul.f32 %v135, 0.6931472
    %v137 = vadd.f32 %v134, 1.0
    %v138 = vadd.f32 %v136, 1.0
    %v139 = vrcp.pop %v137
    %v140 = vmul.f32 %v137, %v139
    %v141 = vsub.f32 1.0, %v140
    %v142 = vmul.f32 %v139, %v141
    %v143 = vadd.f32 %v139, %v142
    %vm144 = vweird.f32 %v137
    %vm145 = vweird.f32 %v139
    %vm146 = vmor %vm144, %vm145
    %v147 = vsel %vm146, %v139, %v143
    %v148 = vand.u32 2147483647, %v137
    %vm149 = vcmp.eq.f32.partialorder %v148, 8.507059e+37
    %v150 = vand.u32 %v137, 2147483648
    %v151 = vor.u32 1.1754944e-38, %v150
    %v152 = vsel %vm149, %v151, %v147
    %v153 = vmul.f32 %v25, %v152
    %v154 = vrcp.pop %v138
    %v155 = vmul.f32 %v138, %v154
    %v156 = vsub.f32 1.0, %v155
    %v157 = vmul.f32 %v154, %v156
    %v158 = vadd.f32 %v154, %v157
    %vm159 = vweird.f32 %v138
    %vm160 = vweird.f32 %v154
    %vm161 = vmor %vm159, %vm160
    %v162 = vsel %vm161, %v154, %v158
    %v163 = vand.u32 2147483647, %v138
    %vm164 = vcmp.eq.f32.partialorder %v163, 8.507059e+37
    %v165 = vand.u32 %v138, 2147483648
    %v166 = vor.u32 1.1754944e-38, %v165
    %v167 = vsel %vm164, %v166, %v162
    %v168 = vmul.f32 %v26, %v167
    %v169 = vtanh.pop %v153
    %v170 = vtanh.pop %v168
    %v171 = vmul.f32 %v129, 0.3
    %v172 = vmul.f32 %v130, 0.3
    %v173 = vmul.f32 %v169, 0.7
    %v174 = vmul.f32 %v170, 0.7
    %v175 = vadd.f32 %v171, %v173
    %v176 = vadd.f32 %v172, %v174
    %v177 = vadd.f32 %v175, 1.0
    %v178 = vadd.f32 %v176, 1.0
    %v179 = vmul.f32 %v177, 0.5
    %v180 = vmul.f32 %v178, 0.5
    %181 = vadd.xlane.f32.xlu0 %v179
    %v182 = vpop.xlane.xlu0 %181
    %183 = vadd.xlane.f32.xlu0 %v180
    %v184 = vpop.xlane.xlu0 %183
    %v185 = vadd.f32 %v182, 1e-10
    %v186 = vadd.f32 %v184, 1e-10
    %v187 = vrcp.pop %v185
    %v188 = vmul.f32 %v185, %v187
    %v189 = vsub.f32 1.0, %v188
    %v190 = vmul.f32 %v187, %v189
    %v191 = vadd.f32 %v187, %v190
    %vm192 = vweird.f32 %v185
    %vm193 = vweird.f32 %v187
    %vm194 = vmor %vm192, %vm193
    %v195 = vsel %vm194, %v187, %v191
    %v196 = vand.u32 2147483647, %v185
    %vm197 = vcmp.eq.f32.partialorder %v196, 8.507059e+37
    %v198 = vand.u32 %v185, 2147483648
    %v199 = vor.u32 1.1754944e-38, %v198
    %v200 = vsel %vm197, %v199, %v195
    %v201 = vrcp.pop %v186
    %v202 = vmul.f32 %v186, %v201
    %v203 = vsub.f32 1.0, %v202
    %v204 = vmul.f32 %v201, %v203
    %v205 = vadd.f32 %v201, %v204
    %vm206 = vweird.f32 %v186
    %vm207 = vweird.f32 %v201
    %vm208 = vmor %vm206, %vm207
    %v209 = vsel %vm208, %v201, %v205
    %v210 = vand.u32 2147483647, %v186
    %vm211 = vcmp.eq.f32.partialorder %v210, 8.507059e+37
    %v212 = vand.u32 %v186, 2147483648
    %v213 = vor.u32 1.1754944e-38, %v212
    %v214 = vsel %vm211, %v213, %v209
    %v215 = vmul.f32 %v179, %v200
    %v216 = vmul.f32 %v180, %v214
    %217 = vst [vmem:[#allocation5] sm:$0xff] %v215
    %218 = vst [vmem:[#allocation5 + $0x8] sm:$0xff] %v216
    // Predicated region
    $region10: #{tpu_custom_call.1} parent=1 // pred_check
      _
    $region11: #{tpu_custom_call.1} parent=1 // pred_check_branch
      %220 = sbr.rel (0) target = $region13
    $region12: #{tpu_custom_call.1} parent=1 // pred_region
      %222 = vsyncadd [#allocation4], 0
      %s223 = sshll.u32 [#allocation5], 4
      %s224 = int_to_ptr.vmem [resolvable:$true] %s223
      %s225 = sshll.u32 %s1, 4
      %s226 = int_to_ptr.hbm [resolvable:$true] %s225
      %231 = dma.vmem_to_hbm [thread:$0]  %s224, 256, %s226, [#allocation4], 128, 128, 8
    $region13: #{tpu_custom_call.1} parent=1 // pred_fallthru
      _
    // Predicated region
    $region14: #{tpu_custom_call.1} parent=1 // pred_check
      _
    $region15: #{tpu_custom_call.1} parent=1 // pred_check_branch
      %233 = sbr.rel (0) target = $region17
    $region16: #{tpu_custom_call.1} parent=1 // pred_region
      %235 = dma.done [#allocation4], 256
    $region17: #{tpu_custom_call.1} parent=1 // pred_fallthru
      _
    %236 = vsyncpa [#allocation3], 1
    %237 = vsyncpa [#allocation4], 1

</llo_original>
